<compile_context>
chip_gen: v7x
topology: tpu7x:2x2x1
jax: 0.10.0
libtpu: 0.0.40
codegen_flags: <defaults>
</compile_context>

<pallas_src>
import functools

import jax
import jax.numpy as jnp
from jax.experimental import pallas as pl
from jax.experimental.pallas import tpu as pltpu


def _round_up(x, m):
    return ((x + m - 1) // m) * m


def _tv_block_kernel(x_ref, gx_ref, gy_ref, *, W, tc, nc, mask_tail):
    """x_ref: (TC, H*W) batch of flattened slabs. Outputs: (1, 1, 128) partials."""
    x = x_ref[...]                                     # streamed dtype (f32/bf16)
    HW = x.shape[1]

    if mask_tail:
        # Tail block: zero out rows past the end of the (un-padded) input.
        i = pl.program_id(0)
        valid = jnp.minimum(nc - i * tc, tc)
        rows = jax.lax.broadcasted_iota(jnp.int32, (tc, 1), 0)
        x = jnp.where(rows < valid, x, jnp.zeros((), x.dtype))

    # grad_x: neighbouring-lane diffs; drop the H-1 row-seam terms (w == W-1).
    dx = x[:, 1:] - x[:, :-1]                          # (TC, HW-1)
    col = jax.lax.broadcasted_iota(jnp.int32, (1, HW - 1), 1)
    keep = (col % W) != (W - 1)
    gx = jnp.sum(jnp.where(keep, jnp.abs(dx), jnp.zeros((), dx.dtype)),
                 dtype=jnp.float32)

    # grad_y: row-to-row diffs == lane shift by W on the flattened layout.
    dy = x[:, W:] - x[:, :-W]                          # (TC, HW-W) == (TC, (H-1)*W)
    gy = jnp.sum(jnp.abs(dy), dtype=jnp.float32)

    # One lane-dense broadcast store per output (no iota/select needed).
    gx_ref[...] = jnp.broadcast_to(gx, (1, 1, 128))
    gy_ref[...] = jnp.broadcast_to(gy, (1, 1, 128))


def spatial_continuity_loss(pred, *, target_block_bytes=6 * 1024 * 1024):
    """Pallas equivalent of SpatialContinuityLoss.forward (NCHW input)."""
    N, C, H, W = pred.shape
    nc = N * C
    HW = H * W
    x = pred.reshape(nc, HW)                           # free, contiguous reshape

    itemsize = jnp.dtype(pred.dtype).itemsize
    # VMEM padding granularity: lanes -> 128, sublanes -> 8 (f32) / 16 (bf16) / 32 (i8).
    sublane = {4: 8, 2: 16, 1: 32}.get(itemsize, 8)
    padded_row_bytes = _round_up(HW, 128) * itemsize

    # Pick TC from the *padded* footprint so one streamed block is ~target bytes.
    max_tc = max(sublane,
                 (target_block_bytes // padded_row_bytes) // sublane * sublane)
    if nc <= max_tc:
        tc = nc                                        # single block: full leading dim
    else:
        tc = max_tc                                    # multiple of 8 by construction
    num_blocks = pl.cdiv(nc, tc)
    mask_tail = (nc % tc) != 0                         # mask OOB rows, no jnp.pad

    kernel = functools.partial(_tv_block_kernel, W=W, tc=tc, nc=nc,
                               mask_tail=mask_tail)

    out_shape = jax.ShapeDtypeStruct((num_blocks, 1, 128), jnp.float32)
    gx_part, gy_part = pl.pallas_call(
        kernel,
        out_shape=(out_shape, out_shape),
        grid_spec=pltpu.PrefetchScalarGridSpec(
            num_scalar_prefetch=0,
            grid=(num_blocks,),
            in_specs=[pl.BlockSpec((tc, HW), lambda i: (i, 0))],
            out_specs=(pl.BlockSpec((1, 1, 128), lambda i: (i, 0, 0)),
                       pl.BlockSpec((1, 1, 128), lambda i: (i, 0, 0))),
        ),
        compiler_params=pltpu.CompilerParams(
            dimension_semantics=("parallel",),         # independent blocks (megacore)
            vmem_limit_bytes=48 * 1024 * 1024,
        ),
    )(x)

    gx_total = jnp.sum(gx_part[:, 0, 0])
    gy_total = jnp.sum(gy_part[:, 0, 0])

    # NOTE: W == 1 or H == 1 yields a zero-element mean (NaN), matching torch.
    n_gx = nc * H * (W - 1)
    n_gy = nc * (H - 1) * W
    return gx_total / n_gx + gy_total / n_gy


def _reference(pred):
    grad_x = jnp.abs(pred[:, :, :, 1:] - pred[:, :, :, :-1])
    grad_y = jnp.abs(pred[:, :, 1:, :] - pred[:, :, :-1, :])
    return jnp.mean(grad_x) + jnp.mean(grad_y)


if __name__ == "__main__":
    key = jax.random.PRNGKey(0)
    pred = jax.random.normal(key, (2, 4, 16, 16), dtype=jnp.float32)

    loss = spatial_continuity_loss(pred)
    loss = jax.block_until_ready(loss)

    ref = _reference(pred)
    assert jnp.allclose(loss, ref, rtol=1e-5, atol=1e-5), (loss, ref)
    print("KERNEL_OK")
</pallas_src>

<mosaic_0001>
module attributes {stable_mosaic.version = 11 : i64} {
  func.func @_tv_block_kernel(%arg0: i32, %arg1: memref<8x256xf32, #tpu.memory_space<vmem>>, %arg2: memref<1x1x128xf32, #tpu.memory_space<vmem>>, %arg3: memref<1x1x128xf32, #tpu.memory_space<vmem>>) attributes {dimension_semantics = [#tpu.dimension_semantics<parallel>], iteration_bounds = array<i64: 1>, scalar_prefetch = 0 : i64, scratch_operands = 0 : i64, tpu.core_type = #tpu.core_type<tc>, window_params = [{transform_indices = @transform_0, window_bounds = array<i64: 8, 256>}, {transform_indices = @transform_1, window_bounds = array<i64: 1, 1, 128>}, {transform_indices = @transform_2, window_bounds = array<i64: 1, 1, 128>}]} {
    %c0 = arith.constant 0 : index
    %c0_0 = arith.constant 0 : index
    %0 = vector.load %arg1[%c0, %c0_0] : memref<8x256xf32, #tpu.memory_space<vmem>>, vector<8x256xf32>
    %1 = vector.extract_strided_slice %0 {offsets = [0, 1], sizes = [8, 255], strides = [1, 1]} : vector<8x256xf32> to vector<8x255xf32>
    %2 = vector.extract_strided_slice %0 {offsets = [0, 0], sizes = [8, 255], strides = [1, 1]} : vector<8x256xf32> to vector<8x255xf32>
    %3 = arith.subf %1, %2 : vector<8x255xf32>
    %4 = tpu.iota {dimensions = array<i32: 1>} : vector<1x255xi32>
    %c16_i32 = arith.constant 16 : i32
    %c0_i32 = arith.constant 0 : i32
    %5 = arith.cmpi eq, %c16_i32, %c0_i32 : i32
    %c1_i32 = arith.constant 1 : i32
    %6 = arith.select %5, %c1_i32, %c16_i32 : i32
    %7 = vector.broadcast %6 : i32 to vector<1x255xi32>
    %8 = arith.remsi %4, %7 : vector<1x255xi32>
    %c0_i32_1 = arith.constant 0 : i32
    %9 = vector.broadcast %c0_i32_1 : i32 to vector<1x255xi32>
    %10 = arith.cmpi ne, %8, %9 : vector<1x255xi32>
    %c0_i32_2 = arith.constant 0 : i32
    %11 = vector.broadcast %c0_i32_2 : i32 to vector<1x255xi32>
    %12 = arith.cmpi slt, %8, %11 : vector<1x255xi32>
    %c0_i32_3 = arith.constant 0 : i32
    %13 = arith.cmpi slt, %6, %c0_i32_3 : i32
    %14 = vector.broadcast %13 : i1 to vector<1x255xi1>
    %15 = vector.broadcast %14 : vector<1x255xi1> to vector<1x255xi1>
    %16 = arith.xori %12, %15 : vector<1x255xi1>
    %17 = arith.andi %16, %10 : vector<1x255xi1>
    %18 = vector.broadcast %6 : i32 to vector<1x255xi32>
    %19 = arith.addi %8, %18 : vector<1x255xi32>
    %20 = arith.select %17, %19, %8 : vector<1x255xi1>, vector<1x255xi32>
    %c15_i32 = arith.constant 15 : i32
    %21 = vector.broadcast %c15_i32 : i32 to vector<1x255xi32>
    %22 = arith.cmpi ne, %20, %21 : vector<1x255xi32>
    %23 = math.absf %3 : vector<8x255xf32>
    %cst = arith.constant 0.000000e+00 : f32
    %24 = vector.shape_cast %22 : vector<1x255xi1> to vector<1x255xi1>
    %25 = vector.broadcast %24 : vector<1x255xi1> to vector<8x255xi1>
    %26 = vector.broadcast %cst : f32 to vector<8x255xf32>
    %27 = arith.select %25, %23, %26 : vector<8x255xi1>, vector<8x255xf32>
    %28 = vector.shape_cast %27 : vector<8x255xf32> to vector<1x8x255xf32>
    %cst_4 = arith.constant dense<0.000000e+00> : vector<1xf32>
    %29 = vector.multi_reduction <add>, %28, %cst_4 [1, 2] : vector<1x8x255xf32> to vector<1xf32>
    %30 = vector.shape_cast %29 : vector<1xf32> to vector<1x1x1xf32>
    %31 = vector.extract %30[0, 0, 0] : f32 from vector<1x1x1xf32>
    %32 = vector.extract_strided_slice %0 {offsets = [0, 16], sizes = [8, 240], strides = [1, 1]} : vector<8x256xf32> to vector<8x240xf32>
    %33 = vector.extract_strided_slice %0 {offsets = [0, 0], sizes = [8, 240], strides = [1, 1]} : vector<8x256xf32> to vector<8x240xf32>
    %34 = arith.subf %32, %33 : vector<8x240xf32>
    %35 = math.absf %34 : vector<8x240xf32>
    %36 = vector.shape_cast %35 : vector<8x240xf32> to vector<1x8x240xf32>
    %cst_5 = arith.constant dense<0.000000e+00> : vector<1xf32>
    %37 = vector.multi_reduction <add>, %36, %cst_5 [1, 2] : vector<1x8x240xf32> to vector<1xf32>
    %38 = vector.shape_cast %37 : vector<1xf32> to vector<1x1x1xf32>
    %39 = vector.extract %38[0, 0, 0] : f32 from vector<1x1x1xf32>
    %40 = vector.broadcast %31 : f32 to vector<1x1x128xf32>
    %c0_6 = arith.constant 0 : index
    %c0_7 = arith.constant 0 : index
    %c0_8 = arith.constant 0 : index
    %41 = vector.load %arg2[%c0_6, %c0_7, %c0_8] : memref<1x1x128xf32, #tpu.memory_space<vmem>>, vector<1x1x128xf32>
    tpu.vector_store %arg2[%c0_6, %c0_7, %c0_8], %40 {strides = array<i32>} : memref<1x1x128xf32, #tpu.memory_space<vmem>>, vector<1x1x128xf32>,
    %42 = vector.broadcast %39 : f32 to vector<1x1x128xf32>
    %c0_9 = arith.constant 0 : index
    %c0_10 = arith.constant 0 : index
    %c0_11 = arith.constant 0 : index
    %43 = vector.load %arg3[%c0_9, %c0_10, %c0_11] : memref<1x1x128xf32, #tpu.memory_space<vmem>>, vector<1x1x128xf32>
    tpu.vector_store %arg3[%c0_9, %c0_10, %c0_11], %42 {strides = array<i32>} : memref<1x1x128xf32, #tpu.memory_space<vmem>>, vector<1x1x128xf32>,
    return
  }
  func.func @transform_0(%arg0: i32) -> (i32, i32) {
    %c0_i32 = arith.constant 0 : i32
    %c0_i32_0 = arith.constant 0 : i32
    return %arg0, %c0_i32 : i32, i32
  }
  func.func @transform_1(%arg0: i32) -> (i32, i32, i32) {
    %c0_i32 = arith.constant 0 : i32
    %c0_i32_0 = arith.constant 0 : i32
    %c0_i32_1 = arith.constant 0 : i32
    return %arg0, %c0_i32, %c0_i32_0 : i32, i32, i32
  }
  func.func @transform_2(%arg0: i32) -> (i32, i32, i32) {
    %c0_i32 = arith.constant 0 : i32
    %c0_i32_0 = arith.constant 0 : i32
    %c0_i32_1 = arith.constant 0 : i32
    return %arg0, %c0_i32, %c0_i32_0 : i32, i32, i32
  }
}

</mosaic_0001>

<llo_original>
// kernel: tpu_custom_call.1
$region0: #{tpu_custom_call.1}
  #allocation0 [shape = 'u32[]', space=smem, size = 0x4, offset = 0x4, fixed_abs, tag = 'smem constant byte address 0x4 - core index']
  #allocation1 [shape = 'u32[144,128]{1,0:T(1,128)}', space=vmem, size = 0x12000, scoped, tag = 'internal scratch']
  %s0 = inlined_call_operand.hbm [shape: f32[8,256], index: 0, kind: input, shape index: {}]
  %s1 = inlined_call_operand.hbm [shape: f32[1,1,128], index: 1, kind: output, shape index: {0}]
  %s2 = inlined_call_operand.hbm [shape: f32[1,1,128], index: 2, kind: output, shape index: {1}]
  %3 = xla_tuple %s1, %s2
  %s4 = sld [smem:[#allocation0]]
  $region26: #{tpu_custom_call.1} parent=0
    _
  %s6 = ssub.s32 1, %s4
  %s7 = scalar_select 0, %s6, %s4
  $region1: #{tpu_custom_call.1} parent=0
    #allocation2 [shape = 'u8[8192]{0}', space=vmem, size = 0x2000, scoped, tag = 'input window, operand 0, single buffered']
    #allocation3 [shape = 's32[1]{0}', space=sflag, size = 0x4, scoped, tag = 'scoped memory for tpu_custom_call.1']
    #allocation4 [shape = 's32[1]{0}', space=sflag, size = 0x4, scoped, tag = 'scoped memory for tpu_custom_call.1']
    #allocation5 [shape = 'u8[512]{0}', space=vmem, size = 0x400, scoped, tag = 'output window, operand 0, single buffered']
    #allocation6 [shape = 'u8[512]{0}', space=vmem, size = 0x400, scoped, tag = 'output window, operand 1, single buffered']
    #allocation7 [shape = 's32[1]{0}', space=sflag, size = 0x4, scoped, tag = 'scoped memory for tpu_custom_call.1']
    %8 = vsyncpa [#allocation3], 0
    %9 = vsyncpa [#allocation4], 0
    %10 = vsyncpa [#allocation7], 0
    // Predicated region
    $region2: #{tpu_custom_call.1} parent=1 // pred_check
      _
    $region3: #{tpu_custom_call.1} parent=1 // pred_check_branch
      %12 = sbr.rel (0) target = $region5
    $region4: #{tpu_custom_call.1} parent=1 // pred_region
      %s14 = ssub.s32 256, 256
      %15 = vsyncadd [#allocation3], %s14
      %s17 = sshll.u32 [#allocation2], 4
      %s18 = int_to_ptr.vmem [resolvable:$true] %s17
      %20 = dma.hbm_to_vmem [thread:$0]  %s0, 256, %s18, [#allocation3]
    $region5: #{tpu_custom_call.1} parent=1 // pred_fallthru
      _
    // Predicated region
    $region6: #{tpu_custom_call.1} parent=1 // pred_check
      _
    $region7: #{tpu_custom_call.1} parent=1 // pred_check_branch
      %22 = sbr.rel (0) target = $region9
    $region8: #{tpu_custom_call.1} parent=1 // pred_region
      %23 = dma.done [#allocation3], 256
    $region9: #{tpu_custom_call.1} parent=1 // pred_fallthru
      _
    %v24 = vld [vmem:[#allocation2] sm:$0xff]
    %v25 = vld [vmem:[#allocation2 + $0x8] sm:$0xff]
    %28 = vrot.lane.b32.xlu0 %v24, 1
    %v29 = vpop.permute.xlu0 %28
    %30 = vrot.lane.b32.xlu0 %v25, 1
    %v31 = vpop.permute.xlu0 %30
    %vm32 = vcmask 7168
    %v33 = vsel %vm32, %v29, %v31
    %v36 = vsub.f32 %v24, %v29
    %v37 = vsub.f32 %v25, %v33
    %v38 = vlaneseq
    %v39 = vand.u32 %v38, 127
    %v40 = vadd.s32 %v39, 128
    %vm41 = vcmp.lt.s32.totalorder %v39, 0
    %v42 = vsub.s32 0, %v39
    %v43 = vsel %vm41, %v42, %v39
    %v44 = vshrl.u32 %v43, 4
    %v45 = vand.u32 %v43, 15
    %v46 = vsub.s32 0, %v45
    %v47 = vsel %vm41, %v46, %v45
    %vm48 = vcmp.lt.s32.totalorder %v40, 0
    %v49 = vsub.s32 0, %v40
    %v50 = vsel %vm48, %v49, %v40
    %v51 = vshrl.u32 %v50, 4
    %v52 = vand.u32 %v50, 15
    %v53 = vsub.s32 0, %v52
    %v54 = vsel %vm48, %v53, %v52
    %vm55 = vcmp.ne.s32.totalorder %v47, 0
    %vm56 = vcmp.ne.s32.totalorder %v54, 0
    %vm57 = vcmp.lt.s32.totalorder %v47, 0
    %vm58 = vcmp.lt.s32.totalorder %v54, 0
    %vm59 = vmand %vm57, %vm55
    %vm60 = vmand %vm58, %vm56
    %v61 = vadd.s32 %v47, 16
    %v62 = vadd.s32 %v54, 16
    %v63 = vsel %vm59, %v61, %v47
    %v64 = vsel %vm60, %v62, %v54
    %vm65 = vcmp.ne.s32.totalorder %v63, 15
    %vm66 = vcmp.ne.s32.totalorder %v64, 15
    %v67 = vand.u32 2147483647, %v36
    %v68 = vand.u32 2147483647, %v37
    %v69 = vsel %vm65, 1, 0
    %v70 = vsel %vm66, 1, 0
    %vm71 = vcmp.eq.s32.totalorder %v69, 1
    %vm72 = vcmp.eq.s32.totalorder %v70, 1
    %75 = vrot.lane.b32.xlu0 %v67, 127
    %v76 = vpop.permute.xlu0 %75
    %77 = vrot.lane.b32.xlu0 %v68, 127
    %v78 = vpop.permute.xlu0 %77
    %vm79 = vcmask 1039360
    %v80 = vsel %vm79, %v76, %v78
    %v83 = vsel %vm71, %v80, 0.0
    %v84 = vsel %vm72, %v78, 0.0
    %v85 = vsel %vm79, %v84, 0.0
    %v86 = vadd.f32 %v83, %v85
    %87 = vadd.xlane.f32.xlu0 %v86
    %v88 = vpop.xlane.xlu0 %87
    %v89 = vrot.slane %v88, 4
    %v90 = vadd.f32 %v88, %v89
    %v91 = vrot.slane %v90, 2
    %v92 = vadd.f32 %v90, %v91
    %v93 = vrot.slane %v92, 1
    %v94 = vadd.f32 %v92, %v93
    %s95 = vtos %v94
    %96 = vrot.lane.b32.xlu0 %v24, 16
    %v97 = vpop.permute.xlu0 %96
    %98 = vrot.lane.b32.xlu0 %v25, 16
    %v99 = vpop.permute.xlu0 %98
    %vm100 = vcmask 130048
    %v101 = vsel %vm100, %v97, %v99
    %v104 = vsub.f32 %v24, %v97
    %v105 = vsub.f32 %v25, %v101
    %v106 = vand.u32 2147483647, %v104
    %v107 = vand.u32 2147483647, %v105
    %110 = vrot.lane.b32.xlu0 %v106, 112
    %v111 = vpop.permute.xlu0 %110
    %112 = vrot.lane.b32.xlu0 %v107, 112
    %v113 = vpop.permute.xlu0 %112
    %vm114 = vcmask 916480
    %v115 = vsel %vm114, %v111, %v113
    %v118 = vsel %vm114, %v113, 0.0
    %v119 = vadd.f32 %v115, %v118
    %120 = vadd.xlane.f32.xlu0 %v119
    %v121 = vpop.xlane.xlu0 %120
    %v122 = vrot.slane %v121, 4
    %v123 = vadd.f32 %v121, %v122
    %v124 = vrot.slane %v123, 2
    %v125 = vadd.f32 %v123, %v124
    %v126 = vrot.slane %v125, 1
    %v127 = vadd.f32 %v125, %v126
    %s128 = vtos %v127
    %v129 = vstv %s95
    %130 = vst [vmem:[#allocation5] sm:$0x1] %v129
    %v131 = vstv %s128
    %132 = vst [vmem:[#allocation6] sm:$0x1] %v131
    // Predicated region
    $region10: #{tpu_custom_call.1} parent=1 // pred_check
      _
    $region11: #{tpu_custom_call.1} parent=1 // pred_check_branch
      %134 = sbr.rel (0) target = $region13
    $region12: #{tpu_custom_call.1} parent=1 // pred_region
      %s136 = ssub.s32 16, 16
      %137 = vsyncadd [#allocation4], %s136
      %s139 = sshll.u32 [#allocation5], 4
      %s140 = int_to_ptr.vmem [resolvable:$true] %s139
      %142 = dma.vmem_to_hbm [thread:$0]  %s140, 16, %s1, [#allocation4]
    $region13: #{tpu_custom_call.1} parent=1 // pred_fallthru
      _
    // Predicated region
    $region14: #{tpu_custom_call.1} parent=1 // pred_check
      _
    $region15: #{tpu_custom_call.1} parent=1 // pred_check_branch
      %144 = sbr.rel (0) target = $region17
    $region16: #{tpu_custom_call.1} parent=1 // pred_region
      %s146 = ssub.s32 16, 16
      %147 = vsyncadd [#allocation7], %s146
      %s149 = sshll.u32 [#allocation6], 4
      %s150 = int_to_ptr.vmem [resolvable:$true] %s149
      %152 = dma.vmem_to_hbm [thread:$0]  %s150, 16, %s2, [#allocation7]
    $region17: #{tpu_custom_call.1} parent=1 // pred_fallthru
      _
    // Predicated region
    $region18: #{tpu_custom_call.1} parent=1 // pred_check
      _
    $region19: #{tpu_custom_call.1} parent=1 // pred_check_branch
      %154 = sbr.rel (0) target = $region21
    $region20: #{tpu_custom_call.1} parent=1 // pred_region
      %155 = dma.done [#allocation4], 16
    $region21: #{tpu_custom_call.1} parent=1 // pred_fallthru
      _
    // Predicated region
    $region22: #{tpu_custom_call.1} parent=1 // pred_check
      _
    $region23: #{tpu_custom_call.1} parent=1 // pred_check_branch
      %157 = sbr.rel (0) target = $region25
    $region24: #{tpu_custom_call.1} parent=1 // pred_region
      %158 = dma.done [#allocation7], 16
    $region25: #{tpu_custom_call.1} parent=1 // pred_fallthru
      _
    %159 = vsyncpa [#allocation3], 1
    %160 = vsyncpa [#allocation4], 1
    %161 = vsyncpa [#allocation7], 1

</llo_original>
